<compile_context>
chip_gen: v7x
topology: tpu7x:2x2x1
jax: 0.10.0
libtpu: 0.0.40
codegen_flags: <defaults>
</compile_context>

<pallas_src>
import functools

import jax
import jax.numpy as jnp
from jax.experimental import pallas as pl
from jax.experimental.pallas import tpu as pltpu


_LANE = 128


def _round_up(x, m):
    return ((x + m - 1) // m) * m


def _vmem_capacity_bytes():
    """Physical VMEM of the local TPU generation (fallback: v7x-sized 64 MiB)."""
    try:
        info = pltpu.get_tpu_info()
        cap = getattr(info, "vmem_capacity_bytes", None)
        if cap:
            return int(cap)
    except Exception:
        pass
    return 64 * 1024 * 1024


def _budgets():
    cap = _vmem_capacity_bytes()
    small_vmem = cap < 100 * 1024 * 1024          # v7x-like: 64 MiB VMEM, 2 TCs
    vmem_limit = min(int(0.80 * cap), 100 * 1024 * 1024)
    fused_budget = int(0.62 * cap)                # ~40 MiB v7x, ~80 MiB v5e/v6e
    a_tile_budget = (8 if small_vmem else 20) * 1024 * 1024
    return small_vmem, vmem_limit, fused_budget, a_tile_budget


# ---------------------------------------------------------------------------
# Path A: fully fused forward pass (one pallas_call, A resident in VMEM).
# ---------------------------------------------------------------------------
def _fused_kernel(num_weights, mm_dtype, a_ref, x_ref, *rest):
    w_refs = rest[:num_weights]
    out_ref = rest[num_weights]

    a = a_ref[...]
    # Degree with self loops: D[i] = sum_j A[i, j] + 1 (integer-valued) — one
    # lane reduction + one exact reciprocal on an [N, 1] column.
    d = jnp.sum(a.astype(jnp.float32), axis=1, keepdims=True) + 1.0
    inv_d = pl.reciprocal(d)

    y = x_ref[...].astype(jnp.float32) * inv_d            # Y_0 = X * invD
    for l in range(num_weights):
        # (A @ Y + Y) @ W with f32 accumulation on the MXU; A already arrives
        # in the MXU dtype (cast in the wrapper, not in-kernel).
        h = jnp.dot(a, y.astype(mm_dtype),
                    preferred_element_type=jnp.float32) + y
        out = jnp.dot(h.astype(mm_dtype), w_refs[l][...].astype(mm_dtype),
                      preferred_element_type=jnp.float32)
        if l < num_weights - 1:
            y = jnp.maximum(out, 0.0) * inv_d              # relu, fold invD
        else:
            out_ref[...] = out.astype(out_ref.dtype)       # last layer: no relu


def _graphcn_fused(a, x, weights, mm_dtype, vmem_limit):
    n, f_out = a.shape[0], weights[-1].shape[1]
    kernel = functools.partial(_fused_kernel, len(weights), mm_dtype)
    in_specs = [pl.BlockSpec(a.shape, lambda i: (0, 0)),
                pl.BlockSpec(x.shape, lambda i: (0, 0))]
    in_specs += [pl.BlockSpec(w.shape, lambda i: (0, 0)) for w in weights]
    return pl.pallas_call(
        kernel,
        out_shape=jax.ShapeDtypeStruct((n, f_out), jnp.float32),
        grid=(1,),
        in_specs=in_specs,
        out_specs=pl.BlockSpec((n, f_out), lambda i: (0, 0)),
        compiler_params=pltpu.CompilerParams(
            dimension_semantics=("arbitrary",),
            vmem_limit_bytes=vmem_limit),
    )(a, x, *weights)


# ---------------------------------------------------------------------------
# Path B: large graphs -- row-tiled kernels.
# ---------------------------------------------------------------------------
def _prep_kernel(mm_dtype, a_ref, x_ref, w_ref, z_ref, invd_ref):
    """Per-row-tile: invD = 1/(rowsum(A)+1);  Z_0 = (X * invD) @ W_0."""
    d = jnp.sum(a_ref[...].astype(jnp.float32), axis=1, keepdims=True) + 1.0
    invd = pl.reciprocal(d)                                  # exact
    y = x_ref[...].astype(jnp.float32) * invd
    z_ref[...] = jnp.dot(y.astype(mm_dtype), w_ref[...].astype(mm_dtype),
                         preferred_element_type=jnp.float32).astype(z_ref.dtype)
    invd_ref[...] = invd


def _layer_kernel(is_last, mm_dtype, tm_resident, a_ref, z_ref, *rest):
    """One GCN layer on a (tm, N) row tile of A.

    h = A_tile @ Z + Z_tile   (Z = Y_l @ W_l from the producing kernel; the
    "+ Z_tile" term is the self loop of A' = A + I).
    Non-last layers also emit the NEXT layer's Z:  (relu(h) * invD) @ W_{l+1}.
    """
    idx = 0
    if tm_resident:
        # Self-loop rows sliced from the already-resident Z (no extra DMA).
        row0 = pl.program_id(0) * tm_resident
        if tm_resident % 8 == 0:
            row0 = pl.multiple_of(row0, 8)
        z_tile = z_ref[pl.ds(row0, tm_resident), :]
    else:
        z_tile = rest[idx][...]
        idx += 1

    h = jnp.dot(a_ref[...].astype(mm_dtype), z_ref[...].astype(mm_dtype),
                preferred_element_type=jnp.float32) + z_tile.astype(jnp.float32)

    if is_last:
        out_ref = rest[idx]
        out_ref[...] = h.astype(out_ref.dtype)
    else:
        invd_ref, w_ref, out_ref = rest[idx], rest[idx + 1], rest[idx + 2]
        y = jnp.maximum(h, 0.0) * invd_ref[...]
        out_ref[...] = jnp.dot(y.astype(mm_dtype), w_ref[...].astype(mm_dtype),
                               preferred_element_type=jnp.float32
                               ).astype(out_ref.dtype)


def _pick_row_tile(n, row_bytes, budget):
    if n <= 128:
        return n
    # Cap: fit the A row tile in the budget, prefer >=128 rows and a grid
    # length >= 4 so both v7x TensorCores (parallel axis) get work.
    cap = min(n, max(budget // max(row_bytes, 1), 8), max(128, n // 4))
    candidates = (2048, 1024, 512, 256, 128, 64, 32, 16, 8)
    for c in candidates:                       # prefer a tile that divides N
        if c <= cap and n % c == 0:
            return c
    for c in candidates:
        if c <= cap:
            return c
    return 8


def _prep_call(a, x, w0, *, mm_dtype, tm, vmem_limit):
    n, f0 = x.shape
    f1 = w0.shape[1]
    kernel = functools.partial(_prep_kernel, mm_dtype)
    return pl.pallas_call(
        kernel,
        out_shape=(jax.ShapeDtypeStruct((n, f1), jnp.float32),
                   jax.ShapeDtypeStruct((n, 1), jnp.float32)),
        grid=(pl.cdiv(n, tm),),
        in_specs=[pl.BlockSpec((tm, n), lambda i: (i, 0)),      # A row tile
                  pl.BlockSpec((tm, f0), lambda i: (i, 0)),     # X row tile
                  pl.BlockSpec((f0, f1), lambda i: (0, 0))],    # W_0 resident
        out_specs=(pl.BlockSpec((tm, f1), lambda i: (i, 0)),    # Z_0 rows
                   pl.BlockSpec((tm, 1), lambda i: (i, 0))),    # invD rows
        compiler_params=pltpu.CompilerParams(
            dimension_semantics=("parallel",),
            vmem_limit_bytes=vmem_limit),
    )(a, x, w0)


def _layer_call(a, z, invd, w, *, is_last, mm_dtype, tm, vmem_limit):
    n = a.shape[0]
    f_in = z.shape[1]
    f_out = f_in if is_last else w.shape[1]
    self_from_resident = (n % tm == 0)
    kernel = functools.partial(_layer_kernel, is_last, mm_dtype,
                               tm if self_from_resident else 0)
    in_specs = [pl.BlockSpec((tm, n), lambda i: (i, 0)),        # A row tile
                pl.BlockSpec((n, f_in), lambda i: (0, 0))]      # Z resident
    args = [a, z]
    if not self_from_resident:
        # Ragged N: let Pallas handle the partial self-loop row tile safely.
        in_specs.append(pl.BlockSpec((tm, f_in), lambda i: (i, 0)))
        args.append(z)
    if not is_last:
        in_specs += [pl.BlockSpec((tm, 1), lambda i: (i, 0)),       # invD rows
                     pl.BlockSpec((f_in, f_out), lambda i: (0, 0))]  # next W
        args += [invd, w]
    return pl.pallas_call(
        kernel,
        out_shape=jax.ShapeDtypeStruct((n, f_out), jnp.float32),
        grid=(pl.cdiv(n, tm),),
        in_specs=in_specs,
        out_specs=pl.BlockSpec((tm, f_out), lambda i: (i, 0)),
        compiler_params=pltpu.CompilerParams(
            dimension_semantics=("parallel",),               # 2 TCs split rows
            vmem_limit_bytes=vmem_limit),
    )(*args)


# ---------------------------------------------------------------------------
# GraphCN wrapper (parameter setup + dispatch = plain-JAX glue).
# ---------------------------------------------------------------------------
def init_graphcn_params(key, num_layers, hid_dims, feat_dims):
    if isinstance(hid_dims, int):
        hid_dims = [hid_dims] * num_layers
    assert len(hid_dims) == num_layers, "Invalid hid_dim vector"
    dims = [feat_dims] + list(hid_dims)
    keys = jax.random.split(key, len(dims) - 1)
    # Mirrors torch.randn((p_h_dims, h_dims)) init, seeded deterministically.
    return [jax.random.normal(keys[i], (dims[i], dims[i + 1]), dtype=jnp.float32)
            for i in range(len(dims) - 1)]


def graphcn_forward(weights, a, x, *, matmul_dtype=jnp.float32,
                    adjacency_is_binary=True, force_tiled=False):
    """GraphCN forward.

    matmul_dtype=jnp.bfloat16 feeds the MXU bf16 inputs (f32 accumulation);
    default f32 preserves reference numerics.  adjacency_is_binary lets the
    tiled path store A as bf16 (exact for 0/1 adjacencies) regardless of
    matmul_dtype, halving the dominant HBM stream.
    """
    a = jnp.squeeze(a, axis=0).astype(jnp.float32)        # [N, N]
    x = jnp.squeeze(x, axis=0).astype(jnp.float32)        # [N, F0]
    n = a.shape[0]
    mm_dtype = jnp.dtype(matmul_dtype)

    # Lane-dense feature dims: zero-pad every width to a multiple of 128.
    # Zero rows/cols propagate exact zeros through matmul/relu, so the math is
    # unchanged; stores become unmasked and MXU output columns dense.
    widths = [x.shape[1]] + [w.shape[1] for w in weights]
    padded = [_round_up(f, _LANE) for f in widths]
    x = jnp.pad(x, ((0, 0), (0, padded[0] - widths[0])))
    weights_p = [jnp.pad(w, ((0, padded[i] - widths[i]),
                             (0, padded[i + 1] - widths[i + 1])))
                 for i, w in enumerate(weights)]
    f_last = widths[-1]

    small_vmem_chip, vmem_limit, fused_budget, a_tile_budget = _budgets()

    # ---- dispatch ------------------------------------------------------------
    fused_bytes = (n * n * mm_dtype.itemsize
                   + 4 * sum(n * f for f in padded)
                   + 4 * sum(fi * fo for fi, fo in zip(padded[:-1], padded[1:])))
    use_fused = (not force_tiled) and (2 * fused_bytes <= fused_budget)
    if small_vmem_chip and len(weights) < 2:
        # v7x: the grid=(1,) fused kernel runs on ONE of the two TensorCores;
        # a single layer only saves one A read — keep both cores busy instead.
        use_fused = False

    if use_fused:
        # Everything (A + intermediates + weights) fits in VMEM: degree + all
        # layers in one kernel, A read from HBM exactly once.
        out = _graphcn_fused(a.astype(mm_dtype), x, weights_p, mm_dtype,
                             vmem_limit)
        return out[:, :f_last]

    # ---- Path B: row-tiled pipeline -------------------------------------------
    # A is the dominant HBM stream (read L+1 times): store it bf16 whenever that
    # is exact (binary adjacency) or bf16 matmuls were requested.
    a_store = (jnp.bfloat16
               if (adjacency_is_binary or mm_dtype == jnp.bfloat16)
               else jnp.float32)
    a = a.astype(a_store)
    tm = _pick_row_tile(n, n * jnp.dtype(a_store).itemsize, a_tile_budget)

    # TODO(synk): for very large N, K-tile the resident Z (contraction grid axis
    # + f32 VMEM accumulator) instead of keeping the whole Z in VMEM.
    z, invd = _prep_call(a, x, weights_p[0], mm_dtype=mm_dtype, tm=tm,
                         vmem_limit=vmem_limit)
    for k in range(len(weights_p)):
        is_last = (k == len(weights_p) - 1)
        z = _layer_call(a, z, invd, None if is_last else weights_p[k + 1],
                        is_last=is_last, mm_dtype=mm_dtype, tm=tm,
                        vmem_limit=vmem_limit)
    return z[:, :f_last]


def graphcn_reference(weights, a, x):
    """Pure-JAX mirror of the PyTorch module (self-check only)."""
    a = jnp.squeeze(a, axis=0)
    x = jnp.squeeze(x, axis=0)
    a = a + jnp.eye(a.shape[0], dtype=a.dtype)
    d = a.sum(axis=1)
    a = (d ** -0.5) * a * (d ** -0.5)     # 1-D broadcast: scales column j by 1/D[j]
    for i, w in enumerate(weights):
        out = (a @ x) @ w
        x = jnp.maximum(out, 0.0) if i < len(weights) - 1 else out
    return x


if __name__ == "__main__":
    # --- small case: exercises the fully fused single-kernel path -----------
    num_layers, hid_dims, feat_dims, num_nodes = 2, 32, 16, 8
    k_a, k_x, k_w = jax.random.split(jax.random.PRNGKey(0), 3)
    A = (jax.random.uniform(k_a, (1, num_nodes, num_nodes)) > 0.5).astype(jnp.float32)
    X = jax.random.normal(k_x, (1, num_nodes, feat_dims), dtype=jnp.float32)
    weights = init_graphcn_params(k_w, num_layers, hid_dims, feat_dims)

    out_small = graphcn_forward(weights, A, X)
    jax.block_until_ready(out_small)
    assert out_small.shape == (num_nodes, hid_dims)
    ref_small = graphcn_reference(weights, A, X)
    assert bool(jnp.allclose(out_small, ref_small, rtol=2e-3, atol=2e-3))

    # --- larger case: exercises the row-tiled multi-kernel path -------------
    n_big, f_big, hid_big = 2048, 64, [64, 32]
    k_a2, k_x2, k_w2 = jax.random.split(jax.random.PRNGKey(1), 3)
    A2 = (jax.random.uniform(k_a2, (1, n_big, n_big)) > 0.5).astype(jnp.float32)
    X2 = jax.random.normal(k_x2, (1, n_big, f_big), dtype=jnp.float32)
    weights2 = init_graphcn_params(k_w2, len(hid_big), hid_big, f_big)
    ref_big = graphcn_reference(weights2, A2, X2)

    out_big = graphcn_forward(weights2, A2, X2, force_tiled=True)
    jax.block_until_ready(out_big)
    assert out_big.shape == (n_big, hid_big[-1])
    assert bool(jnp.allclose(out_big, ref_big, rtol=2e-3, atol=2e-3))

    # bf16 MXU inputs (f32 accumulation): A is exact in bf16 for a 0/1
    # adjacency, only the activation side rounds.
    out_bf16 = graphcn_forward(weights2, A2, X2, force_tiled=True,
                               matmul_dtype=jnp.bfloat16)
    jax.block_until_ready(out_bf16)
    assert bool(jnp.allclose(out_bf16, ref_big, rtol=2e-2, atol=2e-2))

    print("KERNEL_OK")
</pallas_src>

<mosaic_0001>
module attributes {stable_mosaic.version = 11 : i64} {
  func.func @_fused_kernel(%arg0: i32, %arg1: memref<8x8xf32, #tpu.memory_space<vmem>>, %arg2: memref<8x128xf32, #tpu.memory_space<vmem>>, %arg3: memref<128x128xf32, #tpu.memory_space<vmem>>, %arg4: memref<128x128xf32, #tpu.memory_space<vmem>>, %arg5: memref<8x128xf32, #tpu.memory_space<vmem>>) attributes {dimension_semantics = [#tpu.dimension_semantics<arbitrary>], iteration_bounds = array<i64: 1>, scalar_prefetch = 0 : i64, scratch_operands = 0 : i64, tpu.core_type = #tpu.core_type<tc>, window_params = [{pipeline_mode = #tpu.pipeline_mode<synchronous>, transform_indices = @transform_0, window_bounds = array<i64: 8, 8>}, {pipeline_mode = #tpu.pipeline_mode<synchronous>, transform_indices = @transform_1, window_bounds = array<i64: 8, 128>}, {pipeline_mode = #tpu.pipeline_mode<synchronous>, transform_indices = @transform_2, window_bounds = array<i64: 128, 128>}, {pipeline_mode = #tpu.pipeline_mode<synchronous>, transform_indices = @transform_3, window_bounds = array<i64: 128, 128>}, {pipeline_mode = #tpu.pipeline_mode<synchronous>, transform_indices = @transform_4, window_bounds = array<i64: 8, 128>}]} {
    %c0 = arith.constant 0 : index
    %c0_0 = arith.constant 0 : index
    %0 = vector.load %arg1[%c0, %c0_0] : memref<8x8xf32, #tpu.memory_space<vmem>>, vector<8x8xf32>
    %cst = arith.constant dense<0.000000e+00> : vector<8xf32>
    %1 = vector.multi_reduction <add>, %0, %cst [1] : vector<8x8xf32> to vector<8xf32>
    %2 = vector.shape_cast %1 : vector<8xf32> to vector<8x1xf32>
    %cst_1 = arith.constant 1.000000e+00 : f32
    %3 = vector.broadcast %cst_1 : f32 to vector<8x1xf32>
    %4 = arith.addf %2, %3 : vector<8x1xf32>
    %5 = tpu.reciprocal %4 : vector<8x1xf32> -> vector<8x1xf32>
    %c0_2 = arith.constant 0 : index
    %c0_3 = arith.constant 0 : index
    %6 = vector.load %arg2[%c0_2, %c0_3] : memref<8x128xf32, #tpu.memory_space<vmem>>, vector<8x128xf32>
    %7 = vector.broadcast %5 : vector<8x1xf32> to vector<8x128xf32>
    %8 = arith.mulf %6, %7 : vector<8x128xf32>
    %cst_4 = arith.constant dense<0.000000e+00> : vector<8x128xf32>
    %9 = tpu.matmul %0, %8, %cst_4 {dimension_numbers = #tpu.dot_dimension_numbers<[1], [0], [0], [1], [0, 0, 1, 1], [], []>} : vector<8x8xf32>, vector<8x128xf32>, vector<8x128xf32> -> vector<8x128xf32>
    %10 = arith.addf %9, %8 : vector<8x128xf32>
    %c0_5 = arith.constant 0 : index
    %c0_6 = arith.constant 0 : index
    %11 = vector.load %arg3[%c0_5, %c0_6] : memref<128x128xf32, #tpu.memory_space<vmem>>, vector<128x128xf32>
    %cst_7 = arith.constant dense<0.000000e+00> : vector<8x128xf32>
    %12 = tpu.matmul %10, %11, %cst_7 {dimension_numbers = #tpu.dot_dimension_numbers<[1], [0], [0], [1], [0, 0, 1, 1], [], []>} : vector<8x128xf32>, vector<128x128xf32>, vector<8x128xf32> -> vector<8x128xf32>
    %cst_8 = arith.constant 0.000000e+00 : f32
    %13 = vector.broadcast %cst_8 : f32 to vector<8x128xf32>
    %14 = arith.maximumf %12, %13 : vector<8x128xf32>
    %15 = vector.broadcast %5 : vector<8x1xf32> to vector<8x128xf32>
    %16 = arith.mulf %14, %15 : vector<8x128xf32>
    %cst_9 = arith.constant dense<0.000000e+00> : vector<8x128xf32>
    %17 = tpu.matmul %0, %16, %cst_9 {dimension_numbers = #tpu.dot_dimension_numbers<[1], [0], [0], [1], [0, 0, 1, 1], [], []>} : vector<8x8xf32>, vector<8x128xf32>, vector<8x128xf32> -> vector<8x128xf32>
    %18 = arith.addf %17, %16 : vector<8x128xf32>
    %c0_10 = arith.constant 0 : index
    %c0_11 = arith.constant 0 : index
    %19 = vector.load %arg4[%c0_10, %c0_11] : memref<128x128xf32, #tpu.memory_space<vmem>>, vector<128x128xf32>
    %cst_12 = arith.constant dense<0.000000e+00> : vector<8x128xf32>
    %20 = tpu.matmul %18, %19, %cst_12 {dimension_numbers = #tpu.dot_dimension_numbers<[1], [0], [0], [1], [0, 0, 1, 1], [], []>} : vector<8x128xf32>, vector<128x128xf32>, vector<8x128xf32> -> vector<8x128xf32>
    %c0_13 = arith.constant 0 : index
    %c0_14 = arith.constant 0 : index
    %21 = vector.load %arg5[%c0_13, %c0_14] : memref<8x128xf32, #tpu.memory_space<vmem>>, vector<8x128xf32>
    tpu.vector_store %arg5[%c0_13, %c0_14], %20 {strides = array<i32>} : memref<8x128xf32, #tpu.memory_space<vmem>>, vector<8x128xf32>,
    return
  }
  func.func @transform_0(%arg0: i32) -> (i32, i32) {
    %c0_i32 = arith.constant 0 : i32
    %c0_i32_0 = arith.constant 0 : i32
    %c0_i32_1 = arith.constant 0 : i32
    return %c0_i32, %c0_i32_0 : i32, i32
  }
  func.func @transform_1(%arg0: i32) -> (i32, i32) {
    %c0_i32 = arith.constant 0 : i32
    %c0_i32_0 = arith.constant 0 : i32
    %c0_i32_1 = arith.constant 0 : i32
    return %c0_i32, %c0_i32_0 : i32, i32
  }
  func.func @transform_2(%arg0: i32) -> (i32, i32) {
    %c0_i32 = arith.constant 0 : i32
    %c0_i32_0 = arith.constant 0 : i32
    %c0_i32_1 = arith.constant 0 : i32
    return %c0_i32, %c0_i32_0 : i32, i32
  }
  func.func @transform_3(%arg0: i32) -> (i32, i32) {
    %c0_i32 = arith.constant 0 : i32
    %c0_i32_0 = arith.constant 0 : i32
    %c0_i32_1 = arith.constant 0 : i32
    return %c0_i32, %c0_i32_0 : i32, i32
  }
  func.func @transform_4(%arg0: i32) -> (i32, i32) {
    %c0_i32 = arith.constant 0 : i32
    %c0_i32_0 = arith.constant 0 : i32
    %c0_i32_1 = arith.constant 0 : i32
    return %c0_i32, %c0_i32_0 : i32, i32
  }
}

</mosaic_0001>

<llo_original>
// kernel: tpu_custom_call.1
$region0: #{tpu_custom_call.1}
  #allocation0 [shape = 'u32[]', space=smem, size = 0x4, offset = 0x4, fixed_abs, tag = 'smem constant byte address 0x4 - core index']
  #allocation1 [shape = 'u32[144,128]{1,0:T(1,128)}', space=vmem, size = 0x12000, scoped, tag = 'internal scratch']
  %s0 = inlined_call_operand.hbm [shape: f32[8,8], index: 0, kind: input, shape index: {}]
  %s1 = inlined_call_operand.hbm [shape: f32[8,128], index: 1, kind: input, shape index: {}]
  %s2 = inlined_call_operand.hbm [shape: f32[128,128], index: 2, kind: input, shape index: {}]
  %s3 = inlined_call_operand.hbm [shape: f32[128,128], index: 3, kind: input, shape index: {}]
  %s4 = inlined_call_operand.hbm [shape: f32[8,128], index: 4, kind: output, shape index: {}]
  %s5 = sld [smem:[#allocation0]]
  $region42: #{tpu_custom_call.1} parent=0
    _
  %s7 = ssub.s32 1, %s5
  %s8 = scalar_select 0, %s7, %s5
  $region1: #{tpu_custom_call.1} parent=0
    #allocation2 [shape = 'u8[4096]{0}', space=vmem, size = 0x1000, scoped, tag = 'input window, operand 0, single buffered']
    #allocation3 [shape = 's32[1]{0}', space=sflag, size = 0x4, scoped, tag = 'scoped memory for tpu_custom_call.1']
    #allocation4 [shape = 's32[1]{0}', space=sflag, size = 0x4, scoped, tag = 'scoped memory for tpu_custom_call.1']
    #allocation5 [shape = 'u8[4096]{0}', space=vmem, size = 0x1000, scoped, tag = 'input window, operand 1, single buffered']
    #allocation6 [shape = 's32[1]{0}', space=sflag, size = 0x4, scoped, tag = 'scoped memory for tpu_custom_call.1']
    #allocation7 [shape = 'u8[65536]{0}', space=vmem, size = 0x10000, scoped, tag = 'input window, operand 2, single buffered']
    #allocation8 [shape = 'u8[65536]{0}', space=vmem, size = 0x10000, scoped, tag = 'input window, operand 3, single buffered']
    #allocation9 [shape = 's32[1]{0}', space=sflag, size = 0x4, scoped, tag = 'scoped memory for tpu_custom_call.1']
    #allocation10 [shape = 'u8[4096]{0}', space=vmem, size = 0x1000, scoped, tag = 'output window, operand 0, single buffered']
    %9 = vsyncpa [#allocation3], 0
    %10 = vsyncpa [#allocation6], 0
    %11 = vsyncpa [#allocation9], 0
    %12 = vsyncpa [#allocation4], 0
    // Predicated region
    $region2: #{tpu_custom_call.1} parent=1 // pred_check
      _
    $region3: #{tpu_custom_call.1} parent=1 // pred_check_branch
      %14 = sbr.rel (0) target = $region5
    $region4: #{tpu_custom_call.1} parent=1 // pred_region
      %s16 = ssub.s32 128, 128
      %17 = vsyncadd [#allocation3], %s16
      %s19 = sshll.u32 [#allocation2], 4
      %s20 = int_to_ptr.vmem [resolvable:$true] %s19
      %22 = dma.hbm_to_vmem [thread:$0]  %s0, 128, %s20, [#allocation3]
    $region5: #{tpu_custom_call.1} parent=1 // pred_fallthru
      _
    // Predicated region
    $region6: #{tpu_custom_call.1} parent=1 // pred_check
      _
    $region7: #{tpu_custom_call.1} parent=1 // pred_check_branch
      %24 = sbr.rel (0) target = $region9
    $region8: #{tpu_custom_call.1} parent=1 // pred_region
      %s26 = ssub.s32 128, 128
      %27 = vsyncadd [#allocation6], %s26
      %s29 = sshll.u32 [#allocation5], 4
      %s30 = int_to_ptr.vmem [resolvable:$true] %s29
      %32 = dma.hbm_to_vmem [thread:$0]  %s1, 128, %s30, [#allocation6]
    $region9: #{tpu_custom_call.1} parent=1 // pred_fallthru
      _
    // Predicated region
    $region10: #{tpu_custom_call.1} parent=1 // pred_check
      _
    $region11: #{tpu_custom_call.1} parent=1 // pred_check_branch
      %34 = sbr.rel (0) target = $region13
    $region12: #{tpu_custom_call.1} parent=1 // pred_region
      %s36 = ssub.s32 2048, 2048
      %37 = vsyncadd [#allocation6], %s36
      %s38 = sshll.u32 [#allocation7], 4
      %s39 = int_to_ptr.vmem [resolvable:$true] %s38
      %44 = dma.hbm_to_vmem [thread:$0]  %s2, 2048, %s39, [#allocation6], 128, 128, 8
    $region13: #{tpu_custom_call.1} parent=1 // pred_fallthru
      _
    // Predicated region
    $region14: #{tpu_custom_call.1} parent=1 // pred_check
      _
    $region15: #{tpu_custom_call.1} parent=1 // pred_check_branch
      %46 = sbr.rel (0) target = $region17
    $region16: #{tpu_custom_call.1} parent=1 // pred_region
      %s48 = ssub.s32 2048, 2048
      %49 = vsyncadd [#allocation9], %s48
      %s50 = sshll.u32 [#allocation8], 4
      %s51 = int_to_ptr.vmem [resolvable:$true] %s50
      %56 = dma.hbm_to_vmem [thread:$0]  %s3, 2048, %s51, [#allocation9], 128, 128, 8
    $region17: #{tpu_custom_call.1} parent=1 // pred_fallthru
      _
    // Predicated region
    $region18: #{tpu_custom_call.1} parent=1 // pred_check
      _
    $region19: #{tpu_custom_call.1} parent=1 // pred_check_branch
      %58 = sbr.rel (0) target = $region21
    $region20: #{tpu_custom_call.1} parent=1 // pred_region
      %59 = dma.done [#allocation3], 128
    $region21: #{tpu_custom_call.1} parent=1 // pred_fallthru
      _
    // Predicated region
    $region22: #{tpu_custom_call.1} parent=1 // pred_check
      _
    $region23: #{tpu_custom_call.1} parent=1 // pred_check_branch
      %61 = sbr.rel (0) target = $region25
    $region24: #{tpu_custom_call.1} parent=1 // pred_region
      %62 = dma.done [#allocation6], 128
    $region25: #{tpu_custom_call.1} parent=1 // pred_fallthru
      _
    // Predicated region
    $region26: #{tpu_custom_call.1} parent=1 // pred_check
      _
    $region27: #{tpu_custom_call.1} parent=1 // pred_check_branch
      %64 = sbr.rel (0) target = $region29
    $region28: #{tpu_custom_call.1} parent=1 // pred_region
      %65 = dma.done [#allocation6], 2048
    $region29: #{tpu_custom_call.1} parent=1 // pred_fallthru
      _
    // Predicated region
    $region30: #{tpu_custom_call.1} parent=1 // pred_check
      _
    $region31: #{tpu_custom_call.1} parent=1 // pred_check_branch
      %67 = sbr.rel (0) target = $region33
    $region32: #{tpu_custom_call.1} parent=1 // pred_region
      %68 = dma.done [#allocation9], 2048
    $region33: #{tpu_custom_call.1} parent=1 // pred_fallthru
      _
    %v69 = vld [vmem:[#allocation2] sm:$0xff]
    %vm70 = vcmask 64512
    %v71 = vsel %vm70, %v69, 0.0
    %72 = vadd.xlane.f32.xlu0 %v71
    %v73 = vpop.xlane.xlu0 %72
    %v74 = vadd.f32 %v73, 1.0
    %v75 = vrcp.pop %v74
    %v76 = vld [vmem:[#allocation5] sm:$0xff]
    %v77 = vmul.f32 %v76, %v75
    %v79 = vsel %vm70, %v69, 0
    %81 = vmatprep.subr.mxu0 0.0
    %82 = vmatpush1.msra.mxu0 %v77
    %83 = vmatprep.subr.mxu0 0.0
    %84 = vmatpush1.msra.mxu0 0.0
    %85 = vmatprep.subr.mxu0 0.0
    %86 = vmatpush1.msra.mxu0 0.0
    %87 = vmatprep.subr.mxu0 0.0
    %88 = vmatpush1.msra.mxu0 0.0
    %89 = vmatprep.subr.mxu0 0.0
    %90 = vmatpush1.msra.mxu0 0.0
    %91 = vmatprep.subr.mxu0 0.0
    %92 = vmatpush1.msra.mxu0 0.0
    %93 = vmatprep.subr.mxu0 0.0
    %94 = vmatpush1.msra.mxu0 0.0
    %95 = vmatprep.subr.mxu0 0.0
    %96 = vmatpush1.msra.mxu0 0.0
    %97 = vmatprep.subr.mxu0 0.0
    %98 = vmatpush1.msra.mxu0 0.0
    %99 = vmatprep.subr.mxu0 0.0
    %100 = vmatpush1.msra.mxu0 0.0
    %101 = vmatprep.subr.mxu0 0.0
    %102 = vmatpush1.msra.mxu0 0.0
    %103 = vmatprep.subr.mxu0 0.0
    %104 = vmatpush1.msra.mxu0 0.0
    %105 = vmatprep.subr.mxu0 0.0
    %106 = vmatpush1.msra.mxu0 0.0
    %107 = vmatprep.subr.mxu0 0.0
    %108 = vmatpush1.msra.mxu0 0.0
    %109 = vmatprep.subr.mxu0 0.0
    %110 = vmatpush1.msra.mxu0 0.0
    %111 = vmatprep.subr.mxu0 0.0
    %112 = vmatpush1.msra.mxu0 0.0
    %113 = vmatprep.subr.mxu0 0.0
    %114 = vmatpush1.msra.mxu0 0.0
    %115 = vmatprep.subr.mxu0 0.0
    %116 = vmatpush1.msra.mxu0 0.0
    %117 = vmatprep.subr.mxu0 0.0
    %118 = vmatpush1.msra.mxu0 0.0
    %119 = vmatprep.subr.mxu0 0.0
    %120 = vmatpush1.msra.mxu0 0.0
    %121 = vmatprep.subr.mxu0 0.0
    %122 = vmatpush1.msra.mxu0 0.0
    %123 = vmatprep.subr.mxu0 0.0
    %124 = vmatpush1.msra.mxu0 0.0
    %125 = vmatprep.subr.mxu0 0.0
    %126 = vmatpush1.msra.mxu0 0.0
    %127 = vmatprep.subr.mxu0 0.0
    %128 = vmatpush1.msra.mxu0 0.0
    %129 = vmatprep.subr.mxu0 0.0
    %130 = vmatpush1.msra.mxu0 0.0
    %131 = vmatprep.subr.mxu0 0.0
    %132 = vmatpush1.msra.mxu0 0.0
    %133 = vmatprep.subr.mxu0 0.0
    %134 = vmatpush1.msra.mxu0 0.0
    %135 = vmatprep.subr.mxu0 0.0
    %136 = vmatpush1.msra.mxu0 0.0
    %137 = vmatprep.subr.mxu0 0.0
    %138 = vmatpush1.msra.mxu0 0.0
    %139 = vmatprep.subr.mxu0 0.0
    %140 = vmatpush1.msra.mxu0 0.0
    %141 = vmatprep.subr.mxu0 0.0
    %142 = vmatpush1.msra.mxu0 0.0
    %143 = vmatprep.subr.mxu0 0.0
    %144 = vmatpush1.msra.mxu0 0.0
    %145 = vmatprep.mubr.f32.mxu0 0.0
    %146 = vmatmul.mubr.f32.gmra.mrb[0].mxu0 %v79
    %v147 = vpop.f32.mrb[0].mxu0
    %v148 = vadd.f32 %v77, %v147
    %v149 = vpop.f32.mrb[0].mxu0
    %150 = vdwg.mxu0
    %v151 = vld [vmem:[#allocation7] sm:$0xff]
    %v152 = vld [vmem:[#allocation7 + $0x8] sm:$0xff]
    %v153 = vld [vmem:[#allocation7 + $0x10] sm:$0xff]
    %v154 = vld [vmem:[#allocation7 + $0x18] sm:$0xff]
    %v155 = vld [vmem:[#allocation7 + $0x20] sm:$0xff]
    %v156 = vld [vmem:[#allocation7 + $0x28] sm:$0xff]
    %v157 = vld [vmem:[#allocation7 + $0x30] sm:$0xff]
    %v158 = vld [vmem:[#allocation7 + $0x38] sm:$0xff]
    %v159 = vld [vmem:[#allocation7 + $0x40] sm:$0xff]
    %v160 = vld [vmem:[#allocation7 + $0x48] sm:$0xff]
    %v161 = vld [vmem:[#allocation7 + $0x50] sm:$0xff]
    %v162 = vld [vmem:[#allocation7 + $0x58] sm:$0xff]
    %v163 = vld [vmem:[#allocation7 + $0x60] sm:$0xff]
    %v164 = vld [vmem:[#allocation7 + $0x68] sm:$0xff]
    %v165 = vld [vmem:[#allocation7 + $0x70] sm:$0xff]
    %v166 = vld [vmem:[#allocation7 + $0x78] sm:$0xff]
    %167 = vmatprep.subr.mxu0 0.0
    %168 = vmatpush1.msra.mxu0 %v151
    %169 = vmatprep.subr.mxu0 0.0
    %170 = vmatpush1.msra.mxu0 %v152
    %171 = vmatprep.subr.mxu0 0.0
    %172 = vmatpush1.msra.mxu0 %v153
    %173 = vmatprep.subr.mxu0 0.0
    %174 = vmatpush1.msra.mxu0 %v154
    %175 = vmatprep.subr.mxu0 0.0
    %176 = vmatpush1.msra.mxu0 %v155
    %177 = vmatprep.subr.mxu0 0.0
    %178 = vmatpush1.msra.mxu0 %v156
    %179 = vmatprep.subr.mxu0 0.0
    %180 = vmatpush1.msra.mxu0 %v157
    %181 = vmatprep.subr.mxu0 0.0
    %182 = vmatpush1.msra.mxu0 %v158
    %183 = vmatprep.subr.mxu0 0.0
    %184 = vmatpush1.msra.mxu0 %v159
    %185 = vmatprep.subr.mxu0 0.0
    %186 = vmatpush1.msra.mxu0 %v160
    %187 = vmatprep.subr.mxu0 0.0
    %188 = vmatpush1.msra.mxu0 %v161
    %189 = vmatprep.subr.mxu0 0.0
    %190 = vmatpush1.msra.mxu0 %v162
    %191 = vmatprep.subr.mxu0 0.0
    %192 = vmatpush1.msra.mxu0 %v163
    %193 = vmatprep.subr.mxu0 0.0
    %194 = vmatpush1.msra.mxu0 %v164
    %195 = vmatprep.subr.mxu0 0.0
    %196 = vmatpush1.msra.mxu0 %v165
    %197 = vmatprep.subr.mxu0 0.0
    %198 = vmatpush1.msra.mxu0 %v166
    %199 = vmatprep.subr.mxu0 0.0
    %200 = vmatpush1.msra.mxu0 0.0
    %201 = vmatprep.subr.mxu0 0.0
    %202 = vmatpush1.msra.mxu0 0.0
    %203 = vmatprep.subr.mxu0 0.0
    %204 = vmatpush1.msra.mxu0 0.0
    %205 = vmatprep.subr.mxu0 0.0
    %206 = vmatpush1.msra.mxu0 0.0
    %207 = vmatprep.subr.mxu0 0.0
    %208 = vmatpush1.msra.mxu0 0.0
    %209 = vmatprep.subr.mxu0 0.0
    %210 = vmatpush1.msra.mxu0 0.0
    %211 = vmatprep.subr.mxu0 0.0
    %212 = vmatpush1.msra.mxu0 0.0
    %213 = vmatprep.subr.mxu0 0.0
    %214 = vmatpush1.msra.mxu0 0.0
    %215 = vmatprep.subr.mxu0 0.0
    %216 = vmatpush1.msra.mxu0 0.0
    %217 = vmatprep.subr.mxu0 0.0
    %218 = vmatpush1.msra.mxu0 0.0
    %219 = vmatprep.subr.mxu0 0.0
    %220 = vmatpush1.msra.mxu0 0.0
    %221 = vmatprep.subr.mxu0 0.0
    %222 = vmatpush1.msra.mxu0 0.0
    %223 = vmatprep.subr.mxu0 0.0
    %224 = vmatpush1.msra.mxu0 0.0
    %225 = vmatprep.subr.mxu0 0.0
    %226 = vmatpush1.msra.mxu0 0.0
    %227 = vmatprep.subr.mxu0 0.0
    %228 = vmatpush1.msra.mxu0 0.0
    %229 = vmatprep.subr.mxu0 0.0
    %230 = vmatpush1.msra.mxu0 0.0
    %231 = vmatprep.mubr.f32.mxu0 0.0
    %232 = vmatmul.mubr.f32.gmra.mrb[0].mxu0 %v148
    %v233 = vpop.f32.mrb[0].mxu0
    %v234 = vadd.f32 0.0, %v233
    %v235 = vpop.f32.mrb[0].mxu0
    %236 = vdwg.mxu0
    %v237 = vmax.f32 %v234, 0.0
    %v238 = vmul.f32 %v237, %v75
    %239 = vmatprep.subr.mxu0 0.0
    %240 = vmatpush1.msra.mxu0 %v238
    %241 = vmatprep.subr.mxu0 0.0
    %242 = vmatpush1.msra.mxu0 0.0
    %243 = vmatprep.subr.mxu0 0.0
    %244 = vmatpush1.msra.mxu0 0.0
    %245 = vmatprep.subr.mxu0 0.0
    %246 = vmatpush1.msra.mxu0 0.0
    %247 = vmatprep.subr.mxu0 0.0
    %248 = vmatpush1.msra.mxu0 0.0
    %249 = vmatprep.subr.mxu0 0.0
    %250 = vmatpush1.msra.mxu0 0.0
    %251 = vmatprep.subr.mxu0 0.0
    %252 = vmatpush1.msra.mxu0 0.0
    %253 = vmatprep.subr.mxu0 0.0
    %254 = vmatpush1.msra.mxu0 0.0
    %255 = vmatprep.subr.mxu0 0.0
    %256 = vmatpush1.msra.mxu0 0.0
    %257 = vmatprep.subr.mxu0 0.0
    %258 = vmatpush1.msra.mxu0 0.0
    %259 = vmatprep.subr.mxu0 0.0
    %260 = vmatpush1.msra.mxu0 0.0
    %261 = vmatprep.subr.mxu0 0.0
    %262 = vmatpush1.msra.mxu0 0.0
    %263 = vmatprep.subr.mxu0 0.0
    %264 = vmatpush1.msra.mxu0 0.0
    %265 = vmatprep.subr.mxu0 0.0
    %266 = vmatpush1.msra.mxu0 0.0
    %267 = vmatprep.subr.mxu0 0.0
    %268 = vmatpush1.msra.mxu0 0.0
    %269 = vmatprep.subr.mxu0 0.0
    %270 = vmatpush1.msra.mxu0 0.0
    %271 = vmatprep.subr.mxu0 0.0
    %272 = vmatpush1.msra.mxu0 0.0
    %273 = vmatprep.subr.mxu0 0.0
    %274 = vmatpush1.msra.mxu0 0.0
    %275 = vmatprep.subr.mxu0 0.0
    %276 = vmatpush1.msra.mxu0 0.0
    %277 = vmatprep.subr.mxu0 0.0
    %278 = vmatpush1.msra.mxu0 0.0
    %279 = vmatprep.subr.mxu0 0.0
    %280 = vmatpush1.msra.mxu0 0.0
    %281 = vmatprep.subr.mxu0 0.0
    %282 = vmatpush1.msra.mxu0 0.0
    %283 = vmatprep.subr.mxu0 0.0
    %284 = vmatpush1.msra.mxu0 0.0
    %285 = vmatprep.subr.mxu0 0.0
    %286 = vmatpush1.msra.mxu0 0.0
    %287 = vmatprep.subr.mxu0 0.0
    %288 = vmatpush1.msra.mxu0 0.0
    %289 = vmatprep.subr.mxu0 0.0
    %290 = vmatpush1.msra.mxu0 0.0
    %291 = vmatprep.subr.mxu0 0.0
    %292 = vmatpush1.msra.mxu0 0.0
    %293 = vmatprep.subr.mxu0 0.0
    %294 = vmatpush1.msra.mxu0 0.0
    %295 = vmatprep.subr.mxu0 0.0
    %296 = vmatpush1.msra.mxu0 0.0
    %297 = vmatprep.subr.mxu0 0.0
    %298 = vmatpush1.msra.mxu0 0.0
    %299 = vmatprep.subr.mxu0 0.0
    %300 = vmatpush1.msra.mxu0 0.0
    %301 = vmatprep.subr.mxu0 0.0
    %302 = vmatpush1.msra.mxu0 0.0
    %303 = vmatprep.mubr.f32.mxu0 0.0
    %304 = vmatmul.mubr.f32.gmra.mrb[0].mxu0 %v79
    %v305 = vpop.f32.mrb[0].mxu0
    %v306 = vadd.f32 %v238, %v305
    %v307 = vpop.f32.mrb[0].mxu0
    %308 = vdwg.mxu0
    %v309 = vld [vmem:[#allocation8] sm:$0xff]
    %v310 = vld [vmem:[#allocation8 + $0x8] sm:$0xff]
    %v311 = vld [vmem:[#allocation8 + $0x10] sm:$0xff]
    %v312 = vld [vmem:[#allocation8 + $0x18] sm:$0xff]
    %v313 = vld [vmem:[#allocation8 + $0x20] sm:$0xff]
    %v314 = vld [vmem:[#allocation8 + $0x28] sm:$0xff]
    %v315 = vld [vmem:[#allocation8 + $0x30] sm:$0xff]
    %v316 = vld [vmem:[#allocation8 + $0x38] sm:$0xff]
    %v317 = vld [vmem:[#allocation8 + $0x40] sm:$0xff]
    %v318 = vld [vmem:[#allocation8 + $0x48] sm:$0xff]
    %v319 = vld [vmem:[#allocation8 + $0x50] sm:$0xff]
    %v320 = vld [vmem:[#allocation8 + $0x58] sm:$0xff]
    %v321 = vld [vmem:[#allocation8 + $0x60] sm:$0xff]
    %v322 = vld [vmem:[#allocation8 + $0x68] sm:$0xff]
    %v323 = vld [vmem:[#allocation8 + $0x70] sm:$0xff]
    %v324 = vld [vmem:[#allocation8 + $0x78] sm:$0xff]
    %325 = vmatprep.subr.mxu0 0.0
    %326 = vmatpush1.msra.mxu0 %v309
    %327 = vmatprep.subr.mxu0 0.0
    %328 = vmatpush1.msra.mxu0 %v310
    %329 = vmatprep.subr.mxu0 0.0
    %330 = vmatpush1.msra.mxu0 %v311
    %331 = vmatprep.subr.mxu0 0.0
    %332 = vmatpush1.msra.mxu0 %v312
    %333 = vmatprep.subr.mxu0 0.0
    %334 = vmatpush1.msra.mxu0 %v313
    %335 = vmatprep.subr.mxu0 0.0
    %336 = vmatpush1.msra.mxu0 %v314
    %337 = vmatprep.subr.mxu0 0.0
    %338 = vmatpush1.msra.mxu0 %v315
    %339 = vmatprep.subr.mxu0 0.0
    %340 = vmatpush1.msra.mxu0 %v316
    %341 = vmatprep.subr.mxu0 0.0
    %342 = vmatpush1.msra.mxu0 %v317
    %343 = vmatprep.subr.mxu0 0.0
    %344 = vmatpush1.msra.mxu0 %v318
    %345 = vmatprep.subr.mxu0 0.0
    %346 = vmatpush1.msra.mxu0 %v319
    %347 = vmatprep.subr.mxu0 0.0
    %348 = vmatpush1.msra.mxu0 %v320
    %349 = vmatprep.subr.mxu0 0.0
    %350 = vmatpush1.msra.mxu0 %v321
    %351 = vmatprep.subr.mxu0 0.0
    %352 = vmatpush1.msra.mxu0 %v322
    %353 = vmatprep.subr.mxu0 0.0
    %354 = vmatpush1.msra.mxu0 %v323
    %355 = vmatprep.subr.mxu0 0.0
    %356 = vmatpush1.msra.mxu0 %v324
    %357 = vmatprep.subr.mxu0 0.0
    %358 = vmatpush1.msra.mxu0 0.0
    %359 = vmatprep.subr.mxu0 0.0
    %360 = vmatpush1.msra.mxu0 0.0
    %361 = vmatprep.subr.mxu0 0.0
    %362 = vmatpush1.msra.mxu0 0.0
    %363 = vmatprep.subr.mxu0 0.0
    %364 = vmatpush1.msra.mxu0 0.0
    %365 = vmatprep.subr.mxu0 0.0
    %366 = vmatpush1.msra.mxu0 0.0
    %367 = vmatprep.subr.mxu0 0.0
    %368 = vmatpush1.msra.mxu0 0.0
    %369 = vmatprep.subr.mxu0 0.0
    %370 = vmatpush1.msra.mxu0 0.0
    %371 = vmatprep.subr.mxu0 0.0
    %372 = vmatpush1.msra.mxu0 0.0
    %373 = vmatprep.subr.mxu0 0.0
    %374 = vmatpush1.msra.mxu0 0.0
    %375 = vmatprep.subr.mxu0 0.0
    %376 = vmatpush1.msra.mxu0 0.0
    %377 = vmatprep.subr.mxu0 0.0
    %378 = vmatpush1.msra.mxu0 0.0
    %379 = vmatprep.subr.mxu0 0.0
    %380 = vmatpush1.msra.mxu0 0.0
    %381 = vmatprep.subr.mxu0 0.0
    %382 = vmatpush1.msra.mxu0 0.0
    %383 = vmatprep.subr.mxu0 0.0
    %384 = vmatpush1.msra.mxu0 0.0
    %385 = vmatprep.subr.mxu0 0.0
    %386 = vmatpush1.msra.mxu0 0.0
    %387 = vmatprep.subr.mxu0 0.0
    %388 = vmatpush1.msra.mxu0 0.0
    %389 = vmatprep.mubr.f32.mxu0 0.0
    %390 = vmatmul.mubr.f32.gmra.mrb[0].mxu0 %v306
    %v391 = vpop.f32.mrb[0].mxu0
    %v392 = vadd.f32 0.0, %v391
    %v393 = vpop.f32.mrb[0].mxu0
    %394 = vdwg.mxu0
    %395 = vst [vmem:[#allocation10] sm:$0xff] %v392
    // Predicated region
    $region34: #{tpu_custom_call.1} parent=1 // pred_check
      _
    $region35: #{tpu_custom_call.1} parent=1 // pred_check_branch
      %397 = sbr.rel (0) target = $region37
    $region36: #{tpu_custom_call.1} parent=1 // pred_region
      %s399 = ssub.s32 128, 128
      %400 = vsyncadd [#allocation4], %s399
      %s402 = sshll.u32 [#allocation10], 4
      %s403 = int_to_ptr.vmem [resolvable:$true] %s402
      %405 = dma.vmem_to_hbm [thread:$0]  %s403, 128, %s4, [#allocation4]
    $region37: #{tpu_custom_call.1} parent=1 // pred_fallthru
      _
    // Predicated region
    $region38: #{tpu_custom_call.1} parent=1 // pred_check
      _
    $region39: #{tpu_custom_call.1} parent=1 // pred_check_branch
      %407 = sbr.rel (0) target = $region41
    $region40: #{tpu_custom_call.1} parent=1 // pred_region
      %408 = dma.done [#allocation4], 128
    $region41: #{tpu_custom_call.1} parent=1 // pred_fallthru
      _
    %409 = vsyncpa [#allocation3], 1
    %410 = vsyncpa [#allocation6], 1
    %411 = vsyncpa [#allocation9], 1
    %412 = vsyncpa [#allocation4], 1

</llo_original>
